<compile_context>
chip_gen: v7x
topology: tpu7x:2x2x1
jax: 0.10.0
libtpu: 0.0.40
codegen_flags: <defaults>
</compile_context>

<pallas_src>
import jax
import jax.numpy as jnp
from jax.experimental import pallas as pl
from jax.experimental.pallas import tpu as pltpu


def _bnn_scale_kernel(scale_ref, x_ref, o_ref):
    # scale_ref: (1,) f32 in SMEM (whole-array, untiled); x_ref/o_ref: (TR, W) VMEM tiles.
    o_ref[...] = x_ref[...] * scale_ref[0]


def bnn_forward(x, a_mu, a_sigma, key, M):
    """x: any-shape float array. a_mu, a_sigma: shape-(1,) float32. key: jax PRNG key."""
    orig_shape = x.shape
    flat = x.reshape(-1).astype(jnp.float32)
    n = flat.size

    # ---- Monte-Carlo scalar prologue (O(M), done once, outside the kernel) ----
    z = jax.random.normal(key, (int(M),), dtype=jnp.float32)
    scale = (a_mu.reshape(()) + jnp.abs(a_sigma.reshape(())) * jnp.mean(z)).reshape(1)

    # ---- choose a lane-dense 2-D view of x, avoiding pad copies when possible ----
    W = None
    for cand in (1024, 512, 256, 128):
        if n % cand == 0:
            W = cand
            break

    if W is None:
        # fallback: pad to a multiple of 8*128 (one extra pass over HBM, only
        # when no lane width divides N).
        W = 128
        padded_n = -(-n // (W * 8)) * (W * 8)
        flat2 = jnp.zeros((padded_n,), jnp.float32).at[:n].set(flat)
        padded = True
    else:
        padded_n = n
        flat2 = flat            # reshape below is metadata-only
        padded = False

    rows = padded_n // W
    x2d = flat2.reshape(rows, W)

    # ---- tiling: ~2 MiB f32 blocks (e.g. (512, 1024)); TR multiple of 8 ----
    target_rows = max(8, (2 * 1024 * 1024) // (W * 4))
    if rows <= target_rows:
        TR = rows               # single block; block dim == full dim is always legal
    else:
        TR = target_rows        # multiple of 8; partial last block handled by Pallas

    grid = (pl.cdiv(rows, TR),)

    out2d = pl.pallas_call(
        _bnn_scale_kernel,
        out_shape=jax.ShapeDtypeStruct((rows, W), jnp.float32),
        grid=grid,
        in_specs=[
            pl.BlockSpec(memory_space=pltpu.SMEM),        # scale (1,) f32, untiled
            pl.BlockSpec((TR, W), lambda i: (i, 0)),      # x tile in VMEM
        ],
        out_specs=pl.BlockSpec((TR, W), lambda i: (i, 0)),
        compiler_params=pltpu.CompilerParams(
            dimension_semantics=("parallel",),            # lets v7x shard across 2 TCs
        ),
    )(scale, x2d)

    out_flat = out2d.reshape(-1)
    if padded:
        out_flat = out_flat[:n]
    return out_flat.reshape(orig_shape)


if __name__ == "__main__":
    key = jax.random.PRNGKey(0)
    k_mu, k_sigma, k_x, k_sample = jax.random.split(key, 4)

    # nn.Parameter(torch.randn(1)) equivalents.
    a_mu = jax.random.normal(k_mu, (1,), dtype=jnp.float32)
    a_sigma = jax.random.normal(k_sigma, (1,), dtype=jnp.float32)

    M = 8                                   # BNN(M) Monte-Carlo sample count
    x = jax.random.normal(k_x, (2, 4, 16, 16), dtype=jnp.float32)

    out = bnn_forward(x, a_mu, a_sigma, k_sample, M)
    out = jax.block_until_ready(out)

    # Reference (same key -> same samples): x scaled by mean of M Gaussian draws.
    z_ref = jax.random.normal(k_sample, (M,), dtype=jnp.float32)
    scale_ref = a_mu[0] + jnp.abs(a_sigma[0]) * jnp.mean(z_ref)
    expected = x * scale_ref

    assert out.shape == x.shape and out.dtype == jnp.float32
    assert jnp.allclose(out, expected, rtol=1e-5, atol=1e-6)

    print("KERNEL_OK")
</pallas_src>

<mosaic_0001>
module attributes {stable_mosaic.version = 11 : i64} {
  func.func @_bnn_scale_kernel(%arg0: i32, %arg1: memref<1xf32, #tpu.memory_space<smem>>, %arg2: memref<2x1024xf32, #tpu.memory_space<vmem>>, %arg3: memref<2x1024xf32, #tpu.memory_space<vmem>>) attributes {dimension_semantics = [#tpu.dimension_semantics<parallel>], iteration_bounds = array<i64: 1>, scalar_prefetch = 0 : i64, scratch_operands = 0 : i64, tpu.core_type = #tpu.core_type<tc>, window_params = [{transform_indices = @transform_0, window_bounds = array<i64: 1>}, {transform_indices = @transform_1, window_bounds = array<i64: 2, 1024>}, {transform_indices = @transform_2, window_bounds = array<i64: 2, 1024>}]} {
    %c0 = arith.constant 0 : index
    %c0_0 = arith.constant 0 : index
    %0 = vector.load %arg2[%c0, %c0_0] : memref<2x1024xf32, #tpu.memory_space<vmem>>, vector<2x1024xf32>
    %c0_1 = arith.constant 0 : index
    %1 = memref.load %arg1[%c0_1] : memref<1xf32, #tpu.memory_space<smem>>
    %2 = vector.broadcast %1 : f32 to vector<2x1024xf32>
    %3 = arith.mulf %0, %2 : vector<2x1024xf32>
    %c0_2 = arith.constant 0 : index
    %c0_3 = arith.constant 0 : index
    %4 = vector.load %arg3[%c0_2, %c0_3] : memref<2x1024xf32, #tpu.memory_space<vmem>>, vector<2x1024xf32>
    tpu.vector_store %arg3[%c0_2, %c0_3], %3 {strides = array<i32>} : memref<2x1024xf32, #tpu.memory_space<vmem>>, vector<2x1024xf32>,
    return
  }
  func.func @transform_0(%arg0: i32) -> i32 {
    %c0_i32 = arith.constant 0 : i32
    %c0_i32_0 = arith.constant 0 : i32
    return %c0_i32 : i32
  }
  func.func @transform_1(%arg0: i32) -> (i32, i32) {
    %c0_i32 = arith.constant 0 : i32
    %c0_i32_0 = arith.constant 0 : i32
    return %arg0, %c0_i32 : i32, i32
  }
  func.func @transform_2(%arg0: i32) -> (i32, i32) {
    %c0_i32 = arith.constant 0 : i32
    %c0_i32_0 = arith.constant 0 : i32
    return %arg0, %c0_i32 : i32, i32
  }
}

</mosaic_0001>

<llo_original>
// kernel: tpu_custom_call.1
$region0: #{tpu_custom_call.1}
  #allocation0 [shape = 'u32[]', space=smem, size = 0x4, offset = 0x4, fixed_abs, tag = 'smem constant byte address 0x4 - core index']
  #allocation1 [shape = 'u32[144,128]{1,0:T(1,128)}', space=vmem, size = 0x12000, scoped, tag = 'internal scratch']
  #allocation2 [shape = 'f32[1]{0:T(128)S(6)}', space=smem, size = 0x200, scoped, tag = 'scoped memory for tpu_custom_call.1']
  %s0 = inlined_call_operand.<no memory space> [shape: f32[1], index: 0, kind: input, shape index: {}]
  %s1 = inlined_call_operand.hbm [shape: f32[2,1024], index: 1, kind: input, shape index: {}]
  %s2 = inlined_call_operand.hbm [shape: f32[2,1024], index: 2, kind: output, shape index: {}]
  %s3 = sld [smem:[#allocation0]]
  $region22: #{tpu_custom_call.1} parent=0
    _
  %s5 = ssub.s32 1, %s3
  %s6 = scalar_select 0, %s5, %s3
  %7 = sst [smem:[#allocation2]] %s0
  $region1: #{tpu_custom_call.1} parent=0
    #allocation3 [shape = 'u8[8192]{0}', space=vmem, size = 0x2000, scoped, tag = 'input window, operand 1, single buffered']
    #allocation4 [shape = 's32[1]{0}', space=sflag, size = 0x4, scoped, tag = 'scoped memory for tpu_custom_call.1']
    #allocation5 [shape = 's32[1]{0}', space=sflag, size = 0x4, scoped, tag = 'scoped memory for tpu_custom_call.1']
    #allocation6 [shape = 'u8[8192]{0}', space=vmem, size = 0x2000, scoped, tag = 'output window, operand 0, single buffered']
    %8 = vsyncpa [#allocation4], 0
    %9 = vsyncpa [#allocation5], 0
    // Predicated region
    $region2: #{tpu_custom_call.1} parent=1 // pred_check
      _
    $region3: #{tpu_custom_call.1} parent=1 // pred_check_branch
      %11 = sbr.rel (0) target = $region5
    $region4: #{tpu_custom_call.1} parent=1 // pred_region
      _
    $region5: #{tpu_custom_call.1} parent=1 // pred_fallthru
      _
    // Predicated region
    $region6: #{tpu_custom_call.1} parent=1 // pred_check
      _
    $region7: #{tpu_custom_call.1} parent=1 // pred_check_branch
      %13 = sbr.rel (0) target = $region9
    $region8: #{tpu_custom_call.1} parent=1 // pred_region
      %s15 = ssub.s32 256, 256
      %16 = vsyncadd [#allocation4], %s15
      %s18 = sshll.u32 [#allocation3], 4
      %s19 = int_to_ptr.vmem [resolvable:$true] %s18
      %21 = dma.hbm_to_vmem [thread:$0]  %s1, 256, %s19, [#allocation4]
    $region9: #{tpu_custom_call.1} parent=1 // pred_fallthru
      _
    // Predicated region
    $region10: #{tpu_custom_call.1} parent=1 // pred_check
      _
    $region11: #{tpu_custom_call.1} parent=1 // pred_check_branch
      %23 = sbr.rel (0) target = $region13
    $region12: #{tpu_custom_call.1} parent=1 // pred_region
      %24 = dma.done [#allocation4], 256
    $region13: #{tpu_custom_call.1} parent=1 // pred_fallthru
      _
    %v25 = vld [vmem:[#allocation3] sm:$0xff]
    %v26 = vld [vmem:[#allocation3 + $0x8] sm:$0xff]
    %s27 = sld [smem:[#allocation2]]
    %v28 = vstv %s27
    %v29 = vmul.f32 %v25, %v28
    %v30 = vmul.f32 %v26, %v28
    %31 = vst [vmem:[#allocation6] sm:$0xff] %v29
    %32 = vst [vmem:[#allocation6 + $0x8] sm:$0xff] %v30
    // Predicated region
    $region14: #{tpu_custom_call.1} parent=1 // pred_check
      _
    $region15: #{tpu_custom_call.1} parent=1 // pred_check_branch
      %34 = sbr.rel (0) target = $region17
    $region16: #{tpu_custom_call.1} parent=1 // pred_region
      %s36 = ssub.s32 256, 256
      %37 = vsyncadd [#allocation5], %s36
      %s39 = sshll.u32 [#allocation6], 4
      %s40 = int_to_ptr.vmem [resolvable:$true] %s39
      %42 = dma.vmem_to_hbm [thread:$0]  %s40, 256, %s2, [#allocation5]
    $region17: #{tpu_custom_call.1} parent=1 // pred_fallthru
      _
    // Predicated region
    $region18: #{tpu_custom_call.1} parent=1 // pred_check
      _
    $region19: #{tpu_custom_call.1} parent=1 // pred_check_branch
      %44 = sbr.rel (0) target = $region21
    $region20: #{tpu_custom_call.1} parent=1 // pred_region
      %45 = dma.done [#allocation5], 256
    $region21: #{tpu_custom_call.1} parent=1 // pred_fallthru
      _
    %46 = vsyncpa [#allocation4], 1
    %47 = vsyncpa [#allocation5], 1

</llo_original>
